<compile_context>
chip_gen: v5e
topology: v5e:2x2
jax: 0.10.0
libtpu: 0.0.40
codegen_flags: <defaults>
</compile_context>

<pallas_src>
import jax
import jax.numpy as jnp
from jax.experimental import pallas as pl
from jax.experimental.pallas import tpu as pltpu


def _logreg_kernel(x_ref, wt_ref, bias_ref, o_ref):
    # x_ref:    (TM, D)      f32 activations tile
    # wt_ref:   (D, O_pad)   pre-transposed, zero-padded weight (resident)
    # bias_ref: (1, O_pad)   0 for real classes, -1e30 for padded classes
    # o_ref:    (TM, O)      unpadded probabilities tile
    logits = jnp.dot(x_ref[...], wt_ref[...],
                     preferred_element_type=jnp.float32)      # MXU, (TM, O_pad)
    logits = logits + bias_ref[...]                           # kill padded columns
    # Numerically stable softmax over the class axis.
    m = jnp.max(logits, axis=1, keepdims=True)
    e = jnp.exp(logits - m)                                   # padded cols -> 0
    denom = jnp.sum(e, axis=1, keepdims=True)
    probs = e / denom                                         # exact division (free here)
    num_classes = o_ref.shape[-1]
    o_ref[...] = probs[:, :num_classes].astype(o_ref.dtype)   # unpadded store


def prepare_weight(weight):
    """One-time prep of a torch.nn.Linear weight (O, D) -> MXU-friendly layout.

    Returns (w_t, bias, num_classes):
      w_t  : (D, O_pad) f32, transposed and zero-padded to a lane multiple of 128
      bias : (1, O_pad) f32, additive mask row (0 real / -1e30 padded classes)
    """
    O, D = weight.shape
    O_pad = ((O + 127) // 128) * 128
    w_t = jnp.zeros((D, O_pad), jnp.float32).at[:, :O].set(
        jnp.transpose(weight).astype(jnp.float32))
    bias = jnp.full((1, O_pad), -1e30, jnp.float32).at[:, :O].set(0.0)
    return w_t, bias, O


def logreg_forward(x, w_t, bias, num_classes, *, block_b=4096):
    """softmax(x @ weight.T, axis=1) using the prepared (w_t, bias) params."""
    B, D = x.shape
    D2, O_pad = w_t.shape
    assert D == D2
    O = num_classes
    out_shape = jax.ShapeDtypeStruct((B, O), jnp.float32)

    if B <= 256:
        # Tiny problem: single invocation, whole operands resident in VMEM,
        # no pipeline machinery.
        return pl.pallas_call(
            _logreg_kernel,
            out_shape=out_shape,
            in_specs=[pl.BlockSpec(memory_space=pltpu.MemorySpace.VMEM),
                      pl.BlockSpec(memory_space=pltpu.MemorySpace.VMEM),
                      pl.BlockSpec(memory_space=pltpu.MemorySpace.VMEM)],
            out_specs=pl.BlockSpec(memory_space=pltpu.MemorySpace.VMEM),
        )(x, w_t, bias)

    # Gridded path: tile over the batch. Guarantee >= 2 grid points so a v7x
    # chip (2 TensorCores) gets both cores busy; round the tile to a multiple
    # of 8 sublanes.
    num_blocks = max(2, pl.cdiv(B, block_b))
    block_b_eff = -(-B // num_blocks)            # ceil divide
    block_b_eff = ((block_b_eff + 7) // 8) * 8   # sublane-aligned
    grid = (pl.cdiv(B, block_b_eff),)

    return pl.pallas_call(
        _logreg_kernel,
        out_shape=out_shape,
        grid=grid,
        in_specs=[pl.BlockSpec((block_b_eff, D), lambda i: (i, 0)),
                  pl.BlockSpec((D, O_pad), lambda i: (0, 0)),
                  pl.BlockSpec((1, O_pad), lambda i: (0, 0))],
        out_specs=pl.BlockSpec((block_b_eff, O), lambda i: (i, 0)),
        compiler_params=pltpu.CompilerParams(
            dimension_semantics=("parallel",)),
    )(x, w_t, bias)


if __name__ == "__main__":
    # Small shapes consistent with LogRegNet(input_dim, output_dim).
    batch, input_dim, output_dim = 8, 64, 16

    key = jax.random.PRNGKey(0)
    kx, kw = jax.random.split(key)

    x = jax.random.normal(kx, (batch, input_dim), dtype=jnp.float32)
    # torch.nn.Linear(input_dim, output_dim, bias=False).weight: (O, D),
    # uniform init like torch's default.
    bound = 1.0 / (input_dim ** 0.5)
    weight = jax.random.uniform(
        kw, (output_dim, input_dim), dtype=jnp.float32,
        minval=-bound, maxval=bound)

    # One-time weight prep (transpose + pad + padding-mask row).
    w_t, bias, num_classes = prepare_weight(weight)

    # Small path (gridless).
    probs = logreg_forward(x, w_t, bias, num_classes)
    jax.block_until_ready(probs)
    ref = jax.nn.softmax(x @ weight.T, axis=1)
    assert probs.shape == (batch, output_dim)
    assert jnp.allclose(jnp.sum(probs, axis=1), 1.0, atol=1e-5)
    assert jnp.allclose(probs, ref, atol=1e-5, rtol=1e-5)

    # Gridded path (>= 2 parallel grid points), exact multiple of the tile.
    big_b = 4096
    xb = jax.random.normal(jax.random.PRNGKey(1), (big_b, input_dim),
                           dtype=jnp.float32)
    probs_big = logreg_forward(xb, w_t, bias, num_classes)
    jax.block_until_ready(probs_big)
    ref_big = jax.nn.softmax(xb @ weight.T, axis=1)
    assert probs_big.shape == (big_b, output_dim)
    assert jnp.allclose(jnp.sum(probs_big, axis=1), 1.0, atol=1e-5)
    assert jnp.allclose(probs_big, ref_big, atol=1e-5, rtol=1e-5)

    # Gridded path with a partial final tile (B not a multiple of the block).
    odd_b = 1000
    xo = jax.random.normal(jax.random.PRNGKey(2), (odd_b, input_dim),
                           dtype=jnp.float32)
    probs_odd = logreg_forward(xo, w_t, bias, num_classes)
    jax.block_until_ready(probs_odd)
    ref_odd = jax.nn.softmax(xo @ weight.T, axis=1)
    assert probs_odd.shape == (odd_b, output_dim)
    assert jnp.allclose(probs_odd, ref_odd, atol=1e-5, rtol=1e-5)

    print("KERNEL_OK")
</pallas_src>

<mosaic_0001>
module attributes {stable_mosaic.version = 11 : i64} {
  func.func @_logreg_kernel(%arg0: memref<8x64xf32, #tpu.memory_space<vmem>>, %arg1: memref<64x128xf32, #tpu.memory_space<vmem>>, %arg2: memref<1x128xf32, #tpu.memory_space<vmem>>, %arg3: memref<8x16xf32, #tpu.memory_space<vmem>>) attributes {dimension_semantics = [], scalar_prefetch = 0 : i64, scratch_operands = 0 : i64, tpu.core_type = #tpu.core_type<tc>} {
    %c0 = arith.constant 0 : index
    %c0_0 = arith.constant 0 : index
    %0 = vector.load %arg0[%c0, %c0_0] : memref<8x64xf32, #tpu.memory_space<vmem>>, vector<8x64xf32>
    %c0_1 = arith.constant 0 : index
    %c0_2 = arith.constant 0 : index
    %1 = vector.load %arg1[%c0_1, %c0_2] : memref<64x128xf32, #tpu.memory_space<vmem>>, vector<64x128xf32>
    %cst = arith.constant dense<0.000000e+00> : vector<8x128xf32>
    %2 = tpu.matmul %0, %1, %cst {dimension_numbers = #tpu.dot_dimension_numbers<[1], [0], [0], [1], [0, 0, 1, 1], [], []>} : vector<8x64xf32>, vector<64x128xf32>, vector<8x128xf32> -> vector<8x128xf32>
    %c0_3 = arith.constant 0 : index
    %c0_4 = arith.constant 0 : index
    %3 = vector.load %arg2[%c0_3, %c0_4] : memref<1x128xf32, #tpu.memory_space<vmem>>, vector<1x128xf32>
    %4 = vector.broadcast %3 : vector<1x128xf32> to vector<8x128xf32>
    %5 = arith.addf %2, %4 : vector<8x128xf32>
    %cst_5 = arith.constant dense<0xFF800000> : vector<8xf32>
    %6 = vector.multi_reduction <maximumf>, %5, %cst_5 [1] : vector<8x128xf32> to vector<8xf32>
    %7 = vector.shape_cast %6 : vector<8xf32> to vector<8x1xf32>
    %8 = vector.broadcast %7 : vector<8x1xf32> to vector<8x128xf32>
    %9 = arith.subf %5, %8 : vector<8x128xf32>
    %10 = math.exp %9 : vector<8x128xf32>
    %cst_6 = arith.constant dense<0.000000e+00> : vector<8xf32>
    %11 = vector.multi_reduction <add>, %10, %cst_6 [1] : vector<8x128xf32> to vector<8xf32>
    %12 = vector.shape_cast %11 : vector<8xf32> to vector<8x1xf32>
    %13 = vector.broadcast %12 : vector<8x1xf32> to vector<8x128xf32>
    %14 = arith.divf %10, %13 : vector<8x128xf32>
    %15 = vector.extract_strided_slice %14 {offsets = [0, 0], sizes = [8, 16], strides = [1, 1]} : vector<8x128xf32> to vector<8x16xf32>
    %c0_7 = arith.constant 0 : index
    %c0_8 = arith.constant 0 : index
    %16 = vector.load %arg3[%c0_7, %c0_8] : memref<8x16xf32, #tpu.memory_space<vmem>>, vector<8x16xf32>
    tpu.vector_store %arg3[%c0_7, %c0_8], %15 {strides = array<i32>} : memref<8x16xf32, #tpu.memory_space<vmem>>, vector<8x16xf32>,
    return
  }
}

</mosaic_0001>

<llo_original>
// kernel: tpu_custom_call.1
$region0: #{tpu_custom_call.1}
  #allocation0 [shape = 'u32[]', space=smem, size = 0x4, offset = 0x4, fixed_abs, tag = 'smem constant byte address 0x4 - core index']
  #allocation1 [shape = 'u32[72,128]{1,0:T(1,128)}', space=vmem, size = 0x9000, scoped, tag = 'internal scratch']
  %s0 = inlined_call_operand.hbm [shape: f32[8,64], index: 0, kind: input, shape index: {}]
  %s1 = inlined_call_operand.hbm [shape: f32[64,128], index: 1, kind: input, shape index: {}]
  %s2 = inlined_call_operand.vmem [shape: f32[1,128], index: 2, kind: input, shape index: {}]
  %s3 = inlined_call_operand.hbm [shape: f32[8,16], index: 3, kind: output, shape index: {}]
  %s4 = sld [smem:[#allocation0]]
  $region30: #{tpu_custom_call.1} parent=0
    _
  %s6 = ssub.s32 1, %s4
  %s7 = scalar_select 0, %s6, %s4
  $region1: #{tpu_custom_call.1} parent=0
    #allocation2 [shape = 'u8[4096]{0}', space=vmem, size = 0x1000, scoped, tag = 'input window, operand 0, single buffered']
    #allocation3 [shape = 's32[1]{0}', space=sflag, size = 0x4, scoped, tag = 'scoped memory for tpu_custom_call.1']
    #allocation4 [shape = 's32[1]{0}', space=sflag, size = 0x4, scoped, tag = 'scoped memory for tpu_custom_call.1']
    #allocation5 [shape = 'u8[32768]{0}', space=vmem, size = 0x8000, scoped, tag = 'input window, operand 1, single buffered']
    #allocation6 [shape = 's32[1]{0}', space=sflag, size = 0x4, scoped, tag = 'scoped memory for tpu_custom_call.1']
    #allocation7 [shape = 'u8[4096]{0}', space=vmem, size = 0x1000, scoped, tag = 'output window, operand 0, single buffered']
    %8 = vsyncpa [#allocation3], 0
    %9 = vsyncpa [#allocation6], 0
    %10 = vsyncpa [#allocation4], 0
    // Predicated region
    $region2: #{tpu_custom_call.1} parent=1 // pred_check
      _
    $region3: #{tpu_custom_call.1} parent=1 // pred_check_branch
      %12 = sbr.rel (0) target = $region5
    $region4: #{tpu_custom_call.1} parent=1 // pred_region
      %14 = vsyncadd [#allocation3], 0
      %s16 = sshll.u32 %s0, 4
      %s17 = int_to_ptr.hbm [resolvable:$true] %s16
      %s18 = sshll.u32 [#allocation2], 4
      %s19 = int_to_ptr.vmem [resolvable:$true] %s18
      %21 = dma.hbm_to_vmem [thread:$0]  %s17, 128, %s19, [#allocation3]
    $region5: #{tpu_custom_call.1} parent=1 // pred_fallthru
      _
    // Predicated region
    $region6: #{tpu_custom_call.1} parent=1 // pred_check
      _
    $region7: #{tpu_custom_call.1} parent=1 // pred_check_branch
      %23 = sbr.rel (0) target = $region9
    $region8: #{tpu_custom_call.1} parent=1 // pred_region
      %25 = vsyncadd [#allocation6], 0
      %s26 = sshll.u32 %s1, 4
      %s27 = int_to_ptr.hbm [resolvable:$true] %s26
      %s28 = sshll.u32 [#allocation5], 4
      %s29 = int_to_ptr.vmem [resolvable:$true] %s28
      %34 = dma.hbm_to_vmem [thread:$0]  %s27, 1024, %s29, [#allocation6], 128, 128, 8
    $region9: #{tpu_custom_call.1} parent=1 // pred_fallthru
      _
    // Predicated region
    $region10: #{tpu_custom_call.1} parent=1 // pred_check
      _
    $region11: #{tpu_custom_call.1} parent=1 // pred_check_branch
      %36 = sbr.rel (0) target = $region13
    $region12: #{tpu_custom_call.1} parent=1 // pred_region
      _
    $region13: #{tpu_custom_call.1} parent=1 // pred_fallthru
      _
    // Predicated region
    $region14: #{tpu_custom_call.1} parent=1 // pred_check
      _
    $region15: #{tpu_custom_call.1} parent=1 // pred_check_branch
      %38 = sbr.rel (0) target = $region17
    $region16: #{tpu_custom_call.1} parent=1 // pred_region
      %40 = dma.done [#allocation3], 128
    $region17: #{tpu_custom_call.1} parent=1 // pred_fallthru
      _
    // Predicated region
    $region18: #{tpu_custom_call.1} parent=1 // pred_check
      _
    $region19: #{tpu_custom_call.1} parent=1 // pred_check_branch
      %42 = sbr.rel (0) target = $region21
    $region20: #{tpu_custom_call.1} parent=1 // pred_region
      %44 = dma.done [#allocation6], 1024
    $region21: #{tpu_custom_call.1} parent=1 // pred_fallthru
      _
    %v45 = vld [vmem:[#allocation2] sm:$0xff]
    %v46 = vld [vmem:[#allocation5] sm:$0xff]
    %v47 = vld [vmem:[#allocation5 + $0x8] sm:$0xff]
    %v48 = vld [vmem:[#allocation5 + $0x10] sm:$0xff]
    %v49 = vld [vmem:[#allocation5 + $0x18] sm:$0xff]
    %v50 = vld [vmem:[#allocation5 + $0x20] sm:$0xff]
    %v51 = vld [vmem:[#allocation5 + $0x28] sm:$0xff]
    %v52 = vld [vmem:[#allocation5 + $0x30] sm:$0xff]
    %v53 = vld [vmem:[#allocation5 + $0x38] sm:$0xff]
    %v54 = vld [vmem:[%s2] sm:$0x1]
    %v56 = vperm.slane %v54, 0
    %vm58 = vcmask 523264
    %v60 = vsel %vm58, %v45, 0
    %62 = vmatpush.msra.mxu0 0.0
    %63 = vmatpush.msra.mxu0 0.0
    %64 = vmatpush.msra.mxu0 0.0
    %65 = vmatpush.msra.mxu0 0.0
    %66 = vmatpush.msra.mxu0 0.0
    %67 = vmatpush.msra.mxu0 0.0
    %68 = vmatpush.msra.mxu0 0.0
    %69 = vmatpush.msra.mxu0 0.0
    %70 = vmatpush.msra.mxu0 %v53
    %71 = vmatpush.msra.mxu0 %v52
    %72 = vmatpush.msra.mxu0 %v51
    %73 = vmatpush.msra.mxu0 %v50
    %74 = vmatpush.msra.mxu0 %v49
    %75 = vmatpush.msra.mxu0 %v48
    %76 = vmatpush.msra.mxu0 %v47
    %77 = vmatpush.msra.mxu0 %v46
    %78 = vmatmul.f32.gmra.mxu0 %v60
    %v79 = vpop.f32.mrf.mxu0
    %v80 = vadd.f32 %v56, %v79
    %81 = vdwg.mxu0
    %82 = vmax.xlane.f32.xlu0 %v80
    %v83 = vpop.xlane.xlu0 %82
    %v84 = vsub.f32 %v80, %v83
    %v85 = vmul.f32 %v84, 1.442695
    %v86 = vpow.pop %v85
    %87 = vadd.xlane.f32.xlu0 %v86
    %v88 = vpop.xlane.xlu0 %87
    %v89 = vrcp.pop %v88
    %v90 = vmul.f32 %v88, %v89
    %v91 = vsub.f32 1.0, %v90
    %v92 = vmul.f32 %v89, %v91
    %v93 = vadd.f32 %v89, %v92
    %vm94 = vweird.f32 %v88
    %vm95 = vweird.f32 %v89
    %vm96 = vmor %vm94, %vm95
    %v97 = vsel %vm96, %v89, %v93
    %v98 = vand.u32 2147483647, %v88
    %vm99 = vcmp.eq.f32.partialorder %v98, 8.507059e+37
    %v100 = vand.u32 %v88, 2147483648
    %v101 = vor.u32 1.1754944e-38, %v100
    %v102 = vsel %vm99, %v101, %v97
    %v103 = vmul.f32 %v86, %v102
    %vm104 = vcmask 130048
    %105 = vst.msk [vmem:[#allocation7] sm:$0xff] %vm104, %v103
    // Predicated region
    $region22: #{tpu_custom_call.1} parent=1 // pred_check
      _
    $region23: #{tpu_custom_call.1} parent=1 // pred_check_branch
      %107 = sbr.rel (0) target = $region25
    $region24: #{tpu_custom_call.1} parent=1 // pred_region
      %109 = vsyncadd [#allocation4], 0
      %s111 = sshll.u32 [#allocation7], 4
      %s112 = int_to_ptr.vmem [resolvable:$true] %s111
      %s113 = sshll.u32 %s3, 4
      %s114 = int_to_ptr.hbm [resolvable:$true] %s113
      %116 = dma.vmem_to_hbm [thread:$0]  %s112, 128, %s114, [#allocation4]
    $region25: #{tpu_custom_call.1} parent=1 // pred_fallthru
      _
    // Predicated region
    $region26: #{tpu_custom_call.1} parent=1 // pred_check
      _
    $region27: #{tpu_custom_call.1} parent=1 // pred_check_branch
      %118 = sbr.rel (0) target = $region29
    $region28: #{tpu_custom_call.1} parent=1 // pred_region
      %120 = dma.done [#allocation4], 128
    $region29: #{tpu_custom_call.1} parent=1 // pred_fallthru
      _
    %121 = vsyncpa [#allocation3], 1
    %122 = vsyncpa [#allocation6], 1
    %123 = vsyncpa [#allocation4], 1

</llo_original>
